<compile_context>
chip_gen: v7x
topology: tpu7x:2x2x1
jax: 0.10.0
libtpu: 0.0.40
codegen_flags: <defaults>
</compile_context>

<pallas_src>
import math

import jax
import jax.numpy as jnp
from jax.experimental import pallas as pl
from jax.experimental.pallas import tpu as pltpu


def mlp_kernel(x_ref, w1_ref, b1_ref, w2_ref, b2_ref, o_ref):
    # First linear layer: (TM, D_in) @ (D_in, H) + (1, H).  bf16 MXU inputs, f32 acc.
    h = jnp.dot(x_ref[...].astype(jnp.bfloat16), w1_ref[...],
                preferred_element_type=jnp.float32)
    h = h + b1_ref[...]          # f32 VPU
    # Dropout: eval-mode identity.
    h = jnp.maximum(h, 0.0)      # ReLU, f32 VPU
    # Second linear layer: (TM, H) @ (H, D_out) + (1, D_out).
    out = jnp.dot(h.astype(jnp.bfloat16), w2_ref[...],
                  preferred_element_type=jnp.float32)
    out = out + b2_ref[...]
    o_ref[...] = out.astype(o_ref.dtype)


def _round_up(x, m):
    return ((x + m - 1) // m) * m


def mlp_forward(x, w1, b1, w2, b2, *, batch_tile=256):
    """x: (N, C, H, W) float32. w1:(dim_in,dim_hidden) w2:(dim_hidden,dim_out).
    Returns (N, dim_out) float32 (PyTorch MLP.forward, eval mode)."""
    n = x.shape[0]
    dim_in = x.shape[1] * x.shape[-2] * x.shape[-1]
    x2d = x.reshape(n, dim_in).astype(jnp.float32)

    dim_hidden = w1.shape[1]
    dim_out = w2.shape[1]

    # Lane-pad feature dims to multiples of 128 (dense stores, full MXU columns).
    d_in_p = _round_up(dim_in, 128)
    d_h_p = _round_up(dim_hidden, 128)
    d_out_p = _round_up(dim_out, 128)

    # Batch tile: multiple of 8 sublanes, capped at batch_tile; pad N to whole tiles.
    tm = min(batch_tile, _round_up(max(n, 1), 8))
    n_p = _round_up(n, tm)

    # Zero-pad operands once in the wrapper (padded rows/cols contribute exact zeros).
    x_p = jnp.zeros((n_p, d_in_p), jnp.float32).at[:n, :dim_in].set(x2d)
    w1_p = (jnp.zeros((d_in_p, d_h_p), jnp.bfloat16)
            .at[:dim_in, :dim_hidden].set(w1.astype(jnp.bfloat16)))
    b1_p = (jnp.zeros((1, d_h_p), jnp.float32)
            .at[:, :dim_hidden].set(b1.reshape(1, dim_hidden).astype(jnp.float32)))
    w2_p = (jnp.zeros((d_h_p, d_out_p), jnp.bfloat16)
            .at[:dim_hidden, :dim_out].set(w2.astype(jnp.bfloat16)))
    b2_p = (jnp.zeros((1, d_out_p), jnp.float32)
            .at[:, :dim_out].set(b2.reshape(1, dim_out).astype(jnp.float32)))

    grid = (pl.cdiv(n_p, tm),)

    out_p = pl.pallas_call(
        mlp_kernel,
        out_shape=jax.ShapeDtypeStruct((n_p, d_out_p), jnp.float32),
        grid=grid,
        in_specs=[
            pl.BlockSpec((tm, d_in_p), lambda i: (i, 0)),        # x: streams per tile
            pl.BlockSpec((d_in_p, d_h_p), lambda i: (0, 0)),     # w1: VMEM-resident
            pl.BlockSpec((1, d_h_p), lambda i: (0, 0)),          # b1: VMEM-resident
            pl.BlockSpec((d_h_p, d_out_p), lambda i: (0, 0)),    # w2: VMEM-resident
            pl.BlockSpec((1, d_out_p), lambda i: (0, 0)),        # b2: VMEM-resident
        ],
        out_specs=pl.BlockSpec((tm, d_out_p), lambda i: (i, 0)),
        compiler_params=pltpu.CompilerParams(
            dimension_semantics=("parallel",)),
    )(x_p, w1_p, b1_p, w2_p, b2_p)

    return out_p[:n, :dim_out]


def init_params(key, dim_in, dim_hidden, dim_out):
    """Deterministic init mimicking PyTorch nn.Linear default (uniform +/- 1/sqrt(fan_in)).
    Weights stored transposed as (in_features, out_features) so the kernel does x @ W."""
    k1, k2, k3, k4 = jax.random.split(key, 4)
    bound1 = 1.0 / math.sqrt(dim_in)
    bound2 = 1.0 / math.sqrt(dim_hidden)
    w1 = jax.random.uniform(k1, (dim_in, dim_hidden), jnp.float32, -bound1, bound1)
    b1 = jax.random.uniform(k2, (1, dim_hidden), jnp.float32, -bound1, bound1)
    w2 = jax.random.uniform(k3, (dim_hidden, dim_out), jnp.float32, -bound2, bound2)
    b2 = jax.random.uniform(k4, (1, dim_out), jnp.float32, -bound2, bound2)
    return w1, b1, w2, b2


if __name__ == "__main__":
    key = jax.random.PRNGKey(0)
    kx, kp = jax.random.split(key)

    # Small shapes: batch=2, channels=4, spatial=16x16 -> dim_in = 4*16*16 = 1024
    N, C, H, W = 2, 4, 16, 16
    dim_in = C * H * W
    dim_hidden = 32
    dim_out = 10

    x = jax.random.normal(kx, (N, C, H, W), jnp.float32)
    w1, b1, w2, b2 = init_params(kp, dim_in, dim_hidden, dim_out)

    out = mlp_forward(x, w1, b1, w2, b2)
    out = jax.block_until_ready(out)
    assert out.shape == (N, dim_out)

    # Reference 1: plain JAX mimicking the same bf16-input / f32-accumulate dots.
    x2d = x.reshape(N, dim_in)
    h_ref = jnp.dot(x2d.astype(jnp.bfloat16), w1.astype(jnp.bfloat16),
                    preferred_element_type=jnp.float32) + b1
    h_ref = jnp.maximum(h_ref, 0.0)
    ref_bf16 = jnp.dot(h_ref.astype(jnp.bfloat16), w2.astype(jnp.bfloat16),
                       preferred_element_type=jnp.float32) + b2
    assert jnp.allclose(out, ref_bf16, atol=2e-3, rtol=2e-3)

    # Reference 2: full-f32 reference, loose tolerance (bf16 MXU inputs).
    ref_f32 = jnp.maximum(x2d @ w1 + b1, 0.0) @ w2 + b2
    assert jnp.allclose(out, ref_f32, atol=3e-2, rtol=3e-2)

    print("KERNEL_OK")
</pallas_src>

<mosaic_0001>
module attributes {stable_mosaic.version = 11 : i64} {
  func.func @mlp_kernel(%arg0: i32, %arg1: memref<8x1024xf32, #tpu.memory_space<vmem>>, %arg2: memref<1024x128xbf16, #tpu.memory_space<vmem>>, %arg3: memref<1x128xf32, #tpu.memory_space<vmem>>, %arg4: memref<128x128xbf16, #tpu.memory_space<vmem>>, %arg5: memref<1x128xf32, #tpu.memory_space<vmem>>, %arg6: memref<8x128xf32, #tpu.memory_space<vmem>>) attributes {dimension_semantics = [#tpu.dimension_semantics<parallel>], iteration_bounds = array<i64: 1>, scalar_prefetch = 0 : i64, scratch_operands = 0 : i64, tpu.core_type = #tpu.core_type<tc>, window_params = [{transform_indices = @transform_0, window_bounds = array<i64: 8, 1024>}, {pipeline_mode = #tpu.pipeline_mode<synchronous>, transform_indices = @transform_1, window_bounds = array<i64: 1024, 128>}, {pipeline_mode = #tpu.pipeline_mode<synchronous>, transform_indices = @transform_2, window_bounds = array<i64: 1, 128>}, {pipeline_mode = #tpu.pipeline_mode<synchronous>, transform_indices = @transform_3, window_bounds = array<i64: 128, 128>}, {pipeline_mode = #tpu.pipeline_mode<synchronous>, transform_indices = @transform_4, window_bounds = array<i64: 1, 128>}, {transform_indices = @transform_5, window_bounds = array<i64: 8, 128>}]} {
    %c0 = arith.constant 0 : index
    %c0_0 = arith.constant 0 : index
    %0 = vector.load %arg1[%c0, %c0_0] : memref<8x1024xf32, #tpu.memory_space<vmem>>, vector<8x1024xf32>
    %1 = arith.truncf %0 : vector<8x1024xf32> to vector<8x1024xbf16>
    %c0_1 = arith.constant 0 : index
    %c0_2 = arith.constant 0 : index
    %2 = vector.load %arg2[%c0_1, %c0_2] : memref<1024x128xbf16, #tpu.memory_space<vmem>>, vector<1024x128xbf16>
    %cst = arith.constant dense<0.000000e+00> : vector<8x128xf32>
    %3 = tpu.matmul %1, %2, %cst {dimension_numbers = #tpu.dot_dimension_numbers<[1], [0], [0], [1], [0, 0, 1, 1], [], []>} : vector<8x1024xbf16>, vector<1024x128xbf16>, vector<8x128xf32> -> vector<8x128xf32>
    %c0_3 = arith.constant 0 : index
    %c0_4 = arith.constant 0 : index
    %4 = vector.load %arg3[%c0_3, %c0_4] : memref<1x128xf32, #tpu.memory_space<vmem>>, vector<1x128xf32>
    %5 = vector.broadcast %4 : vector<1x128xf32> to vector<8x128xf32>
    %6 = arith.addf %3, %5 : vector<8x128xf32>
    %cst_5 = arith.constant 0.000000e+00 : f32
    %7 = vector.broadcast %cst_5 : f32 to vector<8x128xf32>
    %8 = arith.maximumf %6, %7 : vector<8x128xf32>
    %9 = arith.truncf %8 : vector<8x128xf32> to vector<8x128xbf16>
    %c0_6 = arith.constant 0 : index
    %c0_7 = arith.constant 0 : index
    %10 = vector.load %arg4[%c0_6, %c0_7] : memref<128x128xbf16, #tpu.memory_space<vmem>>, vector<128x128xbf16>
    %cst_8 = arith.constant dense<0.000000e+00> : vector<8x128xf32>
    %11 = tpu.matmul %9, %10, %cst_8 {dimension_numbers = #tpu.dot_dimension_numbers<[1], [0], [0], [1], [0, 0, 1, 1], [], []>} : vector<8x128xbf16>, vector<128x128xbf16>, vector<8x128xf32> -> vector<8x128xf32>
    %c0_9 = arith.constant 0 : index
    %c0_10 = arith.constant 0 : index
    %12 = vector.load %arg5[%c0_9, %c0_10] : memref<1x128xf32, #tpu.memory_space<vmem>>, vector<1x128xf32>
    %13 = vector.broadcast %12 : vector<1x128xf32> to vector<8x128xf32>
    %14 = arith.addf %11, %13 : vector<8x128xf32>
    %c0_11 = arith.constant 0 : index
    %c0_12 = arith.constant 0 : index
    %15 = vector.load %arg6[%c0_11, %c0_12] : memref<8x128xf32, #tpu.memory_space<vmem>>, vector<8x128xf32>
    tpu.vector_store %arg6[%c0_11, %c0_12], %14 {strides = array<i32>} : memref<8x128xf32, #tpu.memory_space<vmem>>, vector<8x128xf32>,
    return
  }
  func.func @transform_0(%arg0: i32) -> (i32, i32) {
    %c0_i32 = arith.constant 0 : i32
    %c0_i32_0 = arith.constant 0 : i32
    return %arg0, %c0_i32 : i32, i32
  }
  func.func @transform_1(%arg0: i32) -> (i32, i32) {
    %c0_i32 = arith.constant 0 : i32
    %c0_i32_0 = arith.constant 0 : i32
    %c0_i32_1 = arith.constant 0 : i32
    return %c0_i32, %c0_i32_0 : i32, i32
  }
  func.func @transform_2(%arg0: i32) -> (i32, i32) {
    %c0_i32 = arith.constant 0 : i32
    %c0_i32_0 = arith.constant 0 : i32
    %c0_i32_1 = arith.constant 0 : i32
    return %c0_i32, %c0_i32_0 : i32, i32
  }
  func.func @transform_3(%arg0: i32) -> (i32, i32) {
    %c0_i32 = arith.constant 0 : i32
    %c0_i32_0 = arith.constant 0 : i32
    %c0_i32_1 = arith.constant 0 : i32
    return %c0_i32, %c0_i32_0 : i32, i32
  }
  func.func @transform_4(%arg0: i32) -> (i32, i32) {
    %c0_i32 = arith.constant 0 : i32
    %c0_i32_0 = arith.constant 0 : i32
    %c0_i32_1 = arith.constant 0 : i32
    return %c0_i32, %c0_i32_0 : i32, i32
  }
  func.func @transform_5(%arg0: i32) -> (i32, i32) {
    %c0_i32 = arith.constant 0 : i32
    %c0_i32_0 = arith.constant 0 : i32
    return %arg0, %c0_i32 : i32, i32
  }
}

</mosaic_0001>

<llo_original>
// kernel: tpu_custom_call.1
$region0: #{tpu_custom_call.1}
  #allocation0 [shape = 'u32[]', space=smem, size = 0x4, offset = 0x4, fixed_abs, tag = 'smem constant byte address 0x4 - core index']
  #allocation1 [shape = 'u32[144,128]{1,0:T(1,128)}', space=vmem, size = 0x12000, scoped, tag = 'internal scratch']
  %s0 = inlined_call_operand.hbm [shape: f32[8,1024], index: 0, kind: input, shape index: {}]
  %s1 = inlined_call_operand.hbm [shape: bf16[1024,128], index: 1, kind: input, shape index: {}]
  %s2 = inlined_call_operand.vmem [shape: f32[1,128], index: 2, kind: input, shape index: {}]
  %s3 = inlined_call_operand.hbm [shape: bf16[128,128], index: 3, kind: input, shape index: {}]
  %s4 = inlined_call_operand.vmem [shape: f32[1,128], index: 4, kind: input, shape index: {}]
  %s5 = inlined_call_operand.hbm [shape: f32[8,128], index: 5, kind: output, shape index: {}]
  %s6 = sld [smem:[#allocation0]]
  $region42: #{tpu_custom_call.1} parent=0
    _
  %s8 = ssub.s32 1, %s6
  %s9 = scalar_select 0, %s8, %s6
  $region1: #{tpu_custom_call.1} parent=0
    #allocation2 [shape = 'u8[32768]{0}', space=vmem, size = 0x8000, scoped, tag = 'input window, operand 0, single buffered']
    #allocation3 [shape = 's32[1]{0}', space=sflag, size = 0x4, scoped, tag = 'scoped memory for tpu_custom_call.1']
    #allocation4 [shape = 's32[1]{0}', space=sflag, size = 0x4, scoped, tag = 'scoped memory for tpu_custom_call.1']
    #allocation5 [shape = 'u8[262144]{0}', space=vmem, size = 0x40000, scoped, tag = 'input window, operand 1, single buffered']
    #allocation6 [shape = 's32[1]{0}', space=sflag, size = 0x4, scoped, tag = 'scoped memory for tpu_custom_call.1']
    #allocation7 [shape = 'u8[32768]{0}', space=vmem, size = 0x8000, scoped, tag = 'input window, operand 3, single buffered']
    #allocation8 [shape = 'u8[4096]{0}', space=vmem, size = 0x1000, scoped, tag = 'output window, operand 0, single buffered']
    %10 = vsyncpa [#allocation3], 0
    %11 = vsyncpa [#allocation6], 0
    %12 = vsyncpa [#allocation4], 0
    // Predicated region
    $region2: #{tpu_custom_call.1} parent=1 // pred_check
      _
    $region3: #{tpu_custom_call.1} parent=1 // pred_check_branch
      %14 = sbr.rel (0) target = $region5
    $region4: #{tpu_custom_call.1} parent=1 // pred_region
      %s16 = ssub.s32 1024, 1024
      %17 = vsyncadd [#allocation3], %s16
      %s19 = sshll.u32 [#allocation2], 4
      %s20 = int_to_ptr.vmem [resolvable:$true] %s19
      %22 = dma.hbm_to_vmem [thread:$0]  %s0, 1024, %s20, [#allocation3]
    $region5: #{tpu_custom_call.1} parent=1 // pred_fallthru
      _
    // Predicated region
    $region6: #{tpu_custom_call.1} parent=1 // pred_check
      _
    $region7: #{tpu_custom_call.1} parent=1 // pred_check_branch
      %24 = sbr.rel (0) target = $region9
    $region8: #{tpu_custom_call.1} parent=1 // pred_region
      %s26 = ssub.s32 8192, 8192
      %27 = vsyncadd [#allocation6], %s26
      %s28 = sshll.u32 [#allocation5], 4
      %s29 = int_to_ptr.vmem [resolvable:$true] %s28
      %34 = dma.hbm_to_vmem [thread:$0]  %s1, 8192, %s29, [#allocation6], 64, 64, 4
    $region9: #{tpu_custom_call.1} parent=1 // pred_fallthru
      _
    // Predicated region
    $region10: #{tpu_custom_call.1} parent=1 // pred_check
      _
    $region11: #{tpu_custom_call.1} parent=1 // pred_check_branch
      %36 = sbr.rel (0) target = $region13
    $region12: #{tpu_custom_call.1} parent=1 // pred_region
      _
    $region13: #{tpu_custom_call.1} parent=1 // pred_fallthru
      _
    // Predicated region
    $region14: #{tpu_custom_call.1} parent=1 // pred_check
      _
    $region15: #{tpu_custom_call.1} parent=1 // pred_check_branch
      %38 = sbr.rel (0) target = $region17
    $region16: #{tpu_custom_call.1} parent=1 // pred_region
      %s40 = ssub.s32 1024, 1024
      %41 = vsyncadd [#allocation6], %s40
      %s42 = sshll.u32 [#allocation7], 4
      %s43 = int_to_ptr.vmem [resolvable:$true] %s42
      %48 = dma.hbm_to_vmem [thread:$0]  %s3, 1024, %s43, [#allocation6], 64, 64, 4
    $region17: #{tpu_custom_call.1} parent=1 // pred_fallthru
      _
    // Predicated region
    $region18: #{tpu_custom_call.1} parent=1 // pred_check
      _
    $region19: #{tpu_custom_call.1} parent=1 // pred_check_branch
      %50 = sbr.rel (0) target = $region21
    $region20: #{tpu_custom_call.1} parent=1 // pred_region
      _
    $region21: #{tpu_custom_call.1} parent=1 // pred_fallthru
      _
    // Predicated region
    $region22: #{tpu_custom_call.1} parent=1 // pred_check
      _
    $region23: #{tpu_custom_call.1} parent=1 // pred_check_branch
      %52 = sbr.rel (0) target = $region25
    $region24: #{tpu_custom_call.1} parent=1 // pred_region
      %53 = dma.done [#allocation3], 1024
    $region25: #{tpu_custom_call.1} parent=1 // pred_fallthru
      _
    // Predicated region
    $region26: #{tpu_custom_call.1} parent=1 // pred_check
      _
    $region27: #{tpu_custom_call.1} parent=1 // pred_check_branch
      %55 = sbr.rel (0) target = $region29
    $region28: #{tpu_custom_call.1} parent=1 // pred_region
      %56 = dma.done [#allocation6], 8192
    $region29: #{tpu_custom_call.1} parent=1 // pred_fallthru
      _
    // Predicated region
    $region30: #{tpu_custom_call.1} parent=1 // pred_check
      _
    $region31: #{tpu_custom_call.1} parent=1 // pred_check_branch
      %58 = sbr.rel (0) target = $region33
    $region32: #{tpu_custom_call.1} parent=1 // pred_region
      %59 = dma.done [#allocation6], 1024
    $region33: #{tpu_custom_call.1} parent=1 // pred_fallthru
      _
    %v61 = vld [vmem:[#allocation2] sm:$0xff]
    %v62 = vld [vmem:[#allocation2 + $0x8] sm:$0xff]
    %v63 = vld [vmem:[#allocation2 + $0x10] sm:$0xff]
    %v64 = vld [vmem:[#allocation2 + $0x18] sm:$0xff]
    %v65 = vld [vmem:[#allocation2 + $0x20] sm:$0xff]
    %v66 = vld [vmem:[#allocation2 + $0x28] sm:$0xff]
    %v67 = vld [vmem:[#allocation2 + $0x30] sm:$0xff]
    %v68 = vld [vmem:[#allocation2 + $0x38] sm:$0xff]
    %v69 = vpack.c.bf16 %v61, %v61
    %v70 = vpack.c.bf16 %v62, %v62
    %v71 = vpack.c.bf16 %v63, %v63
    %v72 = vpack.c.bf16 %v64, %v64
    %v73 = vpack.c.bf16 %v65, %v65
    %v74 = vpack.c.bf16 %v66, %v66
    %v75 = vpack.c.bf16 %v67, %v67
    %v76 = vpack.c.bf16 %v68, %v68
    %v77 = vld [vmem:[#allocation5] sm:$0xf]
    %v78 = vld [vmem:[#allocation5 + $0x4] sm:$0xf]
    %v79 = vld [vmem:[#allocation5 + $0x8] sm:$0xf]
    %v80 = vld [vmem:[#allocation5 + $0xc] sm:$0xf]
    %v81 = vld [vmem:[#allocation5 + $0x10] sm:$0xf]
    %v82 = vld [vmem:[#allocation5 + $0x14] sm:$0xf]
    %v83 = vld [vmem:[#allocation5 + $0x18] sm:$0xf]
    %v84 = vld [vmem:[#allocation5 + $0x1c] sm:$0xf]
    %v85 = vld [vmem:[#allocation5 + $0x20] sm:$0xf]
    %v86 = vld [vmem:[#allocation5 + $0x24] sm:$0xf]
    %v87 = vld [vmem:[#allocation5 + $0x28] sm:$0xf]
    %v88 = vld [vmem:[#allocation5 + $0x2c] sm:$0xf]
    %v89 = vld [vmem:[#allocation5 + $0x30] sm:$0xf]
    %v90 = vld [vmem:[#allocation5 + $0x34] sm:$0xf]
    %v91 = vld [vmem:[#allocation5 + $0x38] sm:$0xf]
    %v92 = vld [vmem:[#allocation5 + $0x3c] sm:$0xf]
    %v93 = vld [vmem:[#allocation5 + $0x40] sm:$0xf]
    %v94 = vld [vmem:[#allocation5 + $0x44] sm:$0xf]
    %v95 = vld [vmem:[#allocation5 + $0x48] sm:$0xf]
    %v96 = vld [vmem:[#allocation5 + $0x4c] sm:$0xf]
    %v97 = vld [vmem:[#allocation5 + $0x50] sm:$0xf]
    %v98 = vld [vmem:[#allocation5 + $0x54] sm:$0xf]
    %v99 = vld [vmem:[#allocation5 + $0x58] sm:$0xf]
    %v100 = vld [vmem:[#allocation5 + $0x5c] sm:$0xf]
    %v101 = vld [vmem:[#allocation5 + $0x60] sm:$0xf]
    %v102 = vld [vmem:[#allocation5 + $0x64] sm:$0xf]
    %v103 = vld [vmem:[#allocation5 + $0x68] sm:$0xf]
    %v104 = vld [vmem:[#allocation5 + $0x6c] sm:$0xf]
    %v105 = vld [vmem:[#allocation5 + $0x70] sm:$0xf]
    %v106 = vld [vmem:[#allocation5 + $0x74] sm:$0xf]
    %v107 = vld [vmem:[#allocation5 + $0x78] sm:$0xf]
    %v108 = vld [vmem:[#allocation5 + $0x7c] sm:$0xf]
    %v109 = vld [vmem:[#allocation5 + $0x80] sm:$0xf]
    %v110 = vld [vmem:[#allocation5 + $0x84] sm:$0xf]
    %v111 = vld [vmem:[#allocation5 + $0x88] sm:$0xf]
    %v112 = vld [vmem:[#allocation5 + $0x8c] sm:$0xf]
    %v113 = vld [vmem:[#allocation5 + $0x90] sm:$0xf]
    %v114 = vld [vmem:[#allocation5 + $0x94] sm:$0xf]
    %v115 = vld [vmem:[#allocation5 + $0x98] sm:$0xf]
    %v116 = vld [vmem:[#allocation5 + $0x9c] sm:$0xf]
    %v117 = vld [vmem:[#allocation5 + $0xa0] sm:$0xf]
    %v118 = vld [vmem:[#allocation5 + $0xa4] sm:$0xf]
    %v119 = vld [vmem:[#allocation5 + $0xa8] sm:$0xf]
    %v120 = vld [vmem:[#allocation5 + $0xac] sm:$0xf]
    %v121 = vld [vmem:[#allocation5 + $0xb0] sm:$0xf]
    %v122 = vld [vmem:[#allocation5 + $0xb4] sm:$0xf]
    %v123 = vld [vmem:[#allocation5 + $0xb8] sm:$0xf]
    %v124 = vld [vmem:[#allocation5 + $0xbc] sm:$0xf]
    %v125 = vld [vmem:[#allocation5 + $0xc0] sm:$0xf]
    %v126 = vld [vmem:[#allocation5 + $0xc4] sm:$0xf]
    %v127 = vld [vmem:[#allocation5 + $0xc8] sm:$0xf]
    %v128 = vld [vmem:[#allocation5 + $0xcc] sm:$0xf]
    %v129 = vld [vmem:[#allocation5 + $0xd0] sm:$0xf]
    %v130 = vld [vmem:[#allocation5 + $0xd4] sm:$0xf]
    %v131 = vld [vmem:[#allocation5 + $0xd8] sm:$0xf]
    %v132 = vld [vmem:[#allocation5 + $0xdc] sm:$0xf]
    %v133 = vld [vmem:[#allocation5 + $0xe0] sm:$0xf]
    %v134 = vld [vmem:[#allocation5 + $0xe4] sm:$0xf]
    %v135 = vld [vmem:[#allocation5 + $0xe8] sm:$0xf]
    %v136 = vld [vmem:[#allocation5 + $0xec] sm:$0xf]
    %v137 = vld [vmem:[#allocation5 + $0xf0] sm:$0xf]
    %v138 = vld [vmem:[#allocation5 + $0xf4] sm:$0xf]
    %v139 = vld [vmem:[#allocation5 + $0xf8] sm:$0xf]
    %v140 = vld [vmem:[#allocation5 + $0xfc] sm:$0xf]
    %v141 = vld [vmem:[#allocation5 + $0x100] sm:$0xf]
    %v142 = vld [vmem:[#allocation5 + $0x104] sm:$0xf]
    %v143 = vld [vmem:[#allocation5 + $0x108] sm:$0xf]
    %v144 = vld [vmem:[#allocation5 + $0x10c] sm:$0xf]
    %v145 = vld [vmem:[#allocation5 + $0x110] sm:$0xf]
    %v146 = vld [vmem:[#allocation5 + $0x114] sm:$0xf]
    %v147 = vld [vmem:[#allocation5 + $0x118] sm:$0xf]
    %v148 = vld [vmem:[#allocation5 + $0x11c] sm:$0xf]
    %v149 = vld [vmem:[#allocation5 + $0x120] sm:$0xf]
    %v150 = vld [vmem:[#allocation5 + $0x124] sm:$0xf]
    %v151 = vld [vmem:[#allocation5 + $0x128] sm:$0xf]
    %v152 = vld [vmem:[#allocation5 + $0x12c] sm:$0xf]
    %v153 = vld [vmem:[#allocation5 + $0x130] sm:$0xf]
    %v154 = vld [vmem:[#allocation5 + $0x134] sm:$0xf]
    %v155 = vld [vmem:[#allocation5 + $0x138] sm:$0xf]
    %v156 = vld [vmem:[#allocation5 + $0x13c] sm:$0xf]
    %v157 = vld [vmem:[#allocation5 + $0x140] sm:$0xf]
    %v158 = vld [vmem:[#allocation5 + $0x144] sm:$0xf]
    %v159 = vld [vmem:[#allocation5 + $0x148] sm:$0xf]
    %v160 = vld [vmem:[#allocation5 + $0x14c] sm:$0xf]
    %v161 = vld [vmem:[#allocation5 + $0x150] sm:$0xf]
    %v162 = vld [vmem:[#allocation5 + $0x154] sm:$0xf]
    %v163 = vld [vmem:[#allocation5 + $0x158] sm:$0xf]
    %v164 = vld [vmem:[#allocation5 + $0x15c] sm:$0xf]
    %v165 = vld [vmem:[#allocation5 + $0x160] sm:$0xf]
    %v166 = vld [vmem:[#allocation5 + $0x164] sm:$0xf]
    %v167 = vld [vmem:[#allocation5 + $0x168] sm:$0xf]
    %v168 = vld [vmem:[#allocation5 + $0x16c] sm:$0xf]
    %v169 = vld [vmem:[#allocation5 + $0x170] sm:$0xf]
    %v170 = vld [vmem:[#allocation5 + $0x174] sm:$0xf]
    %v171 = vld [vmem:[#allocation5 + $0x178] sm:$0xf]
    %v172 = vld [vmem:[#allocation5 + $0x17c] sm:$0xf]
    %v173 = vld [vmem:[#allocation5 + $0x180] sm:$0xf]
    %v174 = vld [vmem:[#allocation5 + $0x184] sm:$0xf]
    %v175 = vld [vmem:[#allocation5 + $0x188] sm:$0xf]
    %v176 = vld [vmem:[#allocation5 + $0x18c] sm:$0xf]
    %v177 = vld [vmem:[#allocation5 + $0x190] sm:$0xf]
    %v178 = vld [vmem:[#allocation5 + $0x194] sm:$0xf]
    %v179 = vld [vmem:[#allocation5 + $0x198] sm:$0xf]
    %v180 = vld [vmem:[#allocation5 + $0x19c] sm:$0xf]
    %v181 = vld [vmem:[#allocation5 + $0x1a0] sm:$0xf]
    %v182 = vld [vmem:[#allocation5 + $0x1a4] sm:$0xf]
    %v183 = vld [vmem:[#allocation5 + $0x1a8] sm:$0xf]
    %v184 = vld [vmem:[#allocation5 + $0x1ac] sm:$0xf]
    %v185 = vld [vmem:[#allocation5 + $0x1b0] sm:$0xf]
    %v186 = vld [vmem:[#allocation5 + $0x1b4] sm:$0xf]
    %v187 = vld [vmem:[#allocation5 + $0x1b8] sm:$0xf]
    %v188 = vld [vmem:[#allocation5 + $0x1bc] sm:$0xf]
    %v189 = vld [vmem:[#allocation5 + $0x1c0] sm:$0xf]
    %v190 = vld [vmem:[#allocation5 + $0x1c4] sm:$0xf]
    %v191 = vld [vmem:[#allocation5 + $0x1c8] sm:$0xf]
    %v192 = vld [vmem:[#allocation5 + $0x1cc] sm:$0xf]
    %v193 = vld [vmem:[#allocation5 + $0x1d0] sm:$0xf]
    %v194 = vld [vmem:[#allocation5 + $0x1d4] sm:$0xf]
    %v195 = vld [vmem:[#allocation5 + $0x1d8] sm:$0xf]
    %v196 = vld [vmem:[#allocation5 + $0x1dc] sm:$0xf]
    %v197 = vld [vmem:[#allocation5 + $0x1e0] sm:$0xf]
    %v198 = vld [vmem:[#allocation5 + $0x1e4] sm:$0xf]
    %v199 = vld [vmem:[#allocation5 + $0x1e8] sm:$0xf]
    %v200 = vld [vmem:[#allocation5 + $0x1ec] sm:$0xf]
    %v201 = vld [vmem:[#allocation5 + $0x1f0] sm:$0xf]
    %v202 = vld [vmem:[#allocation5 + $0x1f4] sm:$0xf]
    %v203 = vld [vmem:[#allocation5 + $0x1f8] sm:$0xf]
    %v204 = vld [vmem:[#allocation5 + $0x1fc] sm:$0xf]
    %v205 = vld [vmem:[%s2] sm:$0x1]
    %v207 = vlaneseq
    %v208 = vshrl.u32 %v207, 7
    %v209 = vsub.s32 0, %v208
    %v210 = vrot.slane %v205, %v209
    %v340 = vunpack.c.l.b16 %v77
    %v341 = vunpack.c.l.b16 %v78
    %v342 = vunpack.c.l.b16 %v79
    %v343 = vunpack.c.l.b16 %v80
    %v344 = vunpack.c.l.b16 %v81
    %v345 = vunpack.c.l.b16 %v82
    %v346 = vunpack.c.l.b16 %v83
    %v347 = vunpack.c.l.b16 %v84
    %v348 = vunpack.c.l.b16 %v85
    %v349 = vunpack.c.l.b16 %v86
    %v350 = vunpack.c.l.b16 %v87
    %v351 = vunpack.c.l.b16 %v88
    %v352 = vunpack.c.l.b16 %v89
    %v353 = vunpack.c.l.b16 %v90
    %v354 = vunpack.c.l.b16 %v91
    %v355 = vunpack.c.l.b16 %v92
    %v356 = vunpack.c.l.b16 %v93
    %v357 = vunpack.c.l.b16 %v94
    %v358 = vunpack.c.l.b16 %v95
    %v359 = vunpack.c.l.b16 %v96
    %v360 = vunpack.c.l.b16 %v97
    %v361 = vunpack.c.l.b16 %v98
    %v362 = vunpack.c.l.b16 %v99
    %v363 = vunpack.c.l.b16 %v100
    %v364 = vunpack.c.l.b16 %v101
    %v365 = vunpack.c.l.b16 %v102
    %v366 = vunpack.c.l.b16 %v103
    %v367 = vunpack.c.l.b16 %v104
    %v368 = vunpack.c.l.b16 %v105
    %v369 = vunpack.c.l.b16 %v106
    %v370 = vunpack.c.l.b16 %v107
    %v371 = vunpack.c.l.b16 %v108
    %v372 = vunpack.c.l.b16 %v109
    %v373 = vunpack.c.l.b16 %v110
    %v374 = vunpack.c.l.b16 %v111
    %v375 = vunpack.c.l.b16 %v112
    %v376 = vunpack.c.l.b16 %v113
    %v377 = vunpack.c.l.b16 %v114
    %v378 = vunpack.c.l.b16 %v115
    %v379 = vunpack.c.l.b16 %v116
    %v380 = vunpack.c.l.b16 %v117
    %v381 = vunpack.c.l.b16 %v118
    %v382 = vunpack.c.l.b16 %v119
    %v383 = vunpack.c.l.b16 %v120
    %v384 = vunpack.c.l.b16 %v121
    %v385 = vunpack.c.l.b16 %v122
    %v386 = vunpack.c.l.b16 %v123
    %v387 = vunpack.c.l.b16 %v124
    %v388 = vunpack.c.l.b16 %v125
    %v389 = vunpack.c.l.b16 %v126
    %v390 = vunpack.c.l.b16 %v127
    %v391 = vunpack.c.l.b16 %v128
    %v392 = vunpack.c.l.b16 %v129
    %v393 = vunpack.c.l.b16 %v130
    %v394 = vunpack.c.l.b16 %v131
    %v395 = vunpack.c.l.b16 %v132
    %v396 = vunpack.c.l.b16 %v133
    %v397 = vunpack.c.l.b16 %v134
    %v398 = vunpack.c.l.b16 %v135
    %v399 = vunpack.c.l.b16 %v136
    %v400 = vunpack.c.l.b16 %v137
    %v401 = vunpack.c.l.b16 %v138
    %v402 = vunpack.c.l.b16 %v139
    %v403 = vunpack.c.l.b16 %v140
    %v404 = vunpack.c.l.b16 %v141
    %v405 = vunpack.c.l.b16 %v142
    %v406 = vunpack.c.l.b16 %v143
    %v407 = vunpack.c.l.b16 %v144
    %v408 = vunpack.c.l.b16 %v145
    %v409 = vunpack.c.l.b16 %v146
    %v410 = vunpack.c.l.b16 %v147
    %v411 = vunpack.c.l.b16 %v148
    %v412 = vunpack.c.l.b16 %v149
    %v413 = vunpack.c.l.b16 %v150
    %v414 = vunpack.c.l.b16 %v151
    %v415 = vunpack.c.l.b16 %v152
    %v416 = vunpack.c.l.b16 %v153
    %v417 = vunpack.c.l.b16 %v154
    %v418 = vunpack.c.l.b16 %v155
    %v419 = vunpack.c.l.b16 %v156
    %v420 = vunpack.c.l.b16 %v157
    %v421 = vunpack.c.l.b16 %v158
    %v422 = vunpack.c.l.b16 %v159
    %v423 = vunpack.c.l.b16 %v160
    %v424 = vunpack.c.l.b16 %v161
    %v425 = vunpack.c.l.b16 %v162
    %v426 = vunpack.c.l.b16 %v163
    %v427 = vunpack.c.l.b16 %v164
    %v428 = vunpack.c.l.b16 %v165
    %v429 = vunpack.c.l.b16 %v166
    %v430 = vunpack.c.l.b16 %v167
    %v431 = vunpack.c.l.b16 %v168
    %v432 = vunpack.c.l.b16 %v169
    %v433 = vunpack.c.l.b16 %v170
    %v434 = vunpack.c.l.b16 %v171
    %v435 = vunpack.c.l.b16 %v172
    %v436 = vunpack.c.l.b16 %v173
    %v437 = vunpack.c.l.b16 %v174
    %v438 = vunpack.c.l.b16 %v175
    %v439 = vunpack.c.l.b16 %v176
    %v440 = vunpack.c.l.b16 %v177
    %v441 = vunpack.c.l.b16 %v178
    %v442 = vunpack.c.l.b16 %v179
    %v443 = vunpack.c.l.b16 %v180
    %v444 = vunpack.c.l.b16 %v181
    %v445 = vunpack.c.l.b16 %v182
    %v446 = vunpack.c.l.b16 %v183
    %v447 = vunpack.c.l.b16 %v184
    %v448 = vunpack.c.l.b16 %v185
    %v449 = vunpack.c.l.b16 %v186
    %v450 = vunpack.c.l.b16 %v187
    %v451 = vunpack.c.l.b16 %v188
    %v452 = vunpack.c.l.b16 %v189
    %v453 = vunpack.c.l.b16 %v190
    %v454 = vunpack.c.l.b16 %v191
    %v455 = vunpack.c.l.b16 %v192
    %v456 = vunpack.c.l.b16 %v193
    %v457 = vunpack.c.l.b16 %v194
    %v458 = vunpack.c.l.b16 %v195
    %v459 = vunpack.c.l.b16 %v196
    %v460 = vunpack.c.l.b16 %v197
    %v461 = vunpack.c.l.b16 %v198
    %v462 = vunpack.c.l.b16 %v199
    %v463 = vunpack.c.l.b16 %v200
    %v464 = vunpack.c.l.b16 %v201
    %v465 = vunpack.c.l.b16 %v202
    %v466 = vunpack.c.l.b16 %v203
    %v467 = vunpack.c.l.b16 %v204
    %v468 = vpack.c.b16 %v341, %v340
    %v469 = vpack.c.b16 %v343, %v342
    %v470 = vpack.c.b16 %v345, %v344
    %v471 = vpack.c.b16 %v347, %v346
    %v472 = vpack.c.b16 %v349, %v348
    %v473 = vpack.c.b16 %v351, %v350
    %v474 = vpack.c.b16 %v353, %v352
    %v475 = vpack.c.b16 %v355, %v354
    %v476 = vpack.c.b16 %v357, %v356
    %v477 = vpack.c.b16 %v359, %v358
    %v478 = vpack.c.b16 %v361, %v360
    %v479 = vpack.c.b16 %v363, %v362
    %v480 = vpack.c.b16 %v365, %v364
    %v481 = vpack.c.b16 %v367, %v366
    %v482 = vpack.c.b16 %v369, %v368
    %v483 = vpack.c.b16 %v371, %v370
    %v484 = vpack.c.b16 %v373, %v372
    %v485 = vpack.c.b16 %v375, %v374
    %v486 = vpack.c.b16 %v377, %v376
    %v487 = vpack.c.b16 %v379, %v378
    %v488 = vpack.c.b16 %v381, %v380
    %v489 = vpack.c.b16 %v383, %v382
    %v490 = vpack.c.b16 %v385, %v384
    %v491 = vpack.c.b16 %v387, %v386
    %v492 = vpack.c.b16 %v389, %v388
    %v493 = vpack.c.b16 %v391, %v390
    %v494 = vpack.c.b16 %v393, %v392
    %v495 = vpack.c.b16 %v395, %v394
    %v496 = vpack.c.b16 %v397, %v396
    %v497 = vpack.c.b16 %v399, %v398
    %v498 = vpack.c.b16 %v401, %v400
    %v499 = vpack.c.b16 %v403, %v402
    %v500 = vpack.c.b16 %v405, %v404
    %v501 = vpack.c.b16 %v407, %v406
    %v502 = vpack.c.b16 %v409, %v408
    %v503 = vpack.c.b16 %v411, %v410
    %v504 = vpack.c.b16 %v413, %v412
    %v505 = vpack.c.b16 %v415, %v414
    %v506 = vpack.c.b16 %v417, %v416
    %v507 = vpack.c.b16 %v419, %v418
    %v508 = vpack.c.b16 %v421, %v420
    %v509 = vpack.c.b16 %v423, %v422
    %v510 = vpack.c.b16 %v425, %v424
    %v511 = vpack.c.b16 %v427, %v426
    %v512 = vpack.c.b16 %v429, %v428
    %v513 = vpack.c.b16 %v431, %v430
    %v514 = vpack.c.b16 %v433, %v432
    %v515 = vpack.c.b16 %v435, %v434
    %v516 = vpack.c.b16 %v437, %v436
    %v517 = vpack.c.b16 %v439, %v438
    %v518 = vpack.c.b16 %v441, %v440
    %v519 = vpack.c.b16 %v443, %v442
    %v520 = vpack.c.b16 %v445, %v444
    %v521 = vpack.c.b16 %v447, %v446
    %v522 = vpack.c.b16 %v449, %v448
    %v523 = vpack.c.b16 %v451, %v450
    %v524 = vpack.c.b16 %v453, %v452
    %v525 = vpack.c.b16 %v455, %v454
    %v526 = vpack.c.b16 %v457, %v456
    %v527 = vpack.c.b16 %v459, %v458
    %v528 = vpack.c.b16 %v461, %v460
    %v529 = vpack.c.b16 %v463, %v462
    %v530 = vpack.c.b16 %v465, %v464
    %v531 = vpack.c.b16 %v467, %v466
    %596 = vmatprep.subr.bf16.mxu0 0
    %597 = vmatpush1.bf16.msra.mxu0 %v468
    %598 = vmatprep.subr.bf16.mxu0 0
    %599 = vmatpush1.bf16.msra.mxu0 %v469
    %600 = vmatprep.subr.bf16.mxu0 0
    %601 = vmatpush1.bf16.msra.mxu0 %v470
    %602 = vmatprep.subr.bf16.mxu0 0
    %603 = vmatpush1.bf16.msra.mxu0 %v471
    %604 = vmatprep.subr.bf16.mxu0 0
    %605 = vmatpush1.bf16.msra.mxu0 %v472
    %606 = vmatprep.subr.bf16.mxu0 0
    %607 = vmatpush1.bf16.msra.mxu0 %v473
    %608 = vmatprep.subr.bf16.mxu0 0
    %609 = vmatpush1.bf16.msra.mxu0 %v474
    %610 = vmatprep.subr.bf16.mxu0 0
    %611 = vmatpush1.bf16.msra.mxu0 %v475
    %612 = vmatprep.subr.bf16.mxu0 0
    %613 = vmatpush1.bf16.msra.mxu0 %v476
    %614 = vmatprep.subr.bf16.mxu0 0
    %615 = vmatpush1.bf16.msra.mxu0 %v477
    %616 = vmatprep.subr.bf16.mxu0 0
    %617 = vmatpush1.bf16.msra.mxu0 %v478
    %618 = vmatprep.subr.bf16.mxu0 0
    %619 = vmatpush1.bf16.msra.mxu0 %v479
    %620 = vmatprep.subr.bf16.mxu0 0
    %621 = vmatpush1.bf16.msra.mxu0 %v480
    %622 = vmatprep.subr.bf16.mxu0 0
    %623 = vmatpush1.bf16.msra.mxu0 %v481
    %624 = vmatprep.subr.bf16.mxu0 0
    %625 = vmatpush1.bf16.msra.mxu0 %v482
    %626 = vmatprep.subr.bf16.mxu0 0
    %627 = vmatpush1.bf16.msra.mxu0 %v483
    %628 = vmatprep.mubr.bf16.mxu0 %v70
    %629 = vmatmul.mubr.bf16.gmra.mrb[0].mxu0 %v69
    %v630 = vpop.f32.mrb[0].mxu0
    %v631 = vadd.f32 %v210, %v630
    %v632 = vpop.f32.mrb[0].mxu0
    %v633 = vpop.f32.mrb[0].mxu0
    %v634 = vpop.f32.mrb[0].mxu0
    %635 = vdwg.mxu0
    %636 = vmatprep.subr.bf16.mxu0 0
    %637 = vmatpush1.bf16.msra.mxu0 %v484
    %638 = vmatprep.subr.bf16.mxu0 0
    %639 = vmatpush1.bf16.msra.mxu0 %v485
    %640 = vmatprep.subr.bf16.mxu0 0
    %641 = vmatpush1.bf16.msra.mxu0 %v486
    %642 = vmatprep.subr.bf16.mxu0 0
    %643 = vmatpush1.bf16.msra.mxu0 %v487
    %644 = vmatprep.subr.bf16.mxu0 0
    %645 = vmatpush1.bf16.msra.mxu0 %v488
    %646 = vmatprep.subr.bf16.mxu0 0
    %647 = vmatpush1.bf16.msra.mxu0 %v489
    %648 = vmatprep.subr.bf16.mxu0 0
    %649 = vmatpush1.bf16.msra.mxu0 %v490
    %650 = vmatprep.subr.bf16.mxu0 0
    %651 = vmatpush1.bf16.msra.mxu0 %v491
    %652 = vmatprep.subr.bf16.mxu0 0
    %653 = vmatpush1.bf16.msra.mxu0 %v492
    %654 = vmatprep.subr.bf16.mxu0 0
    %655 = vmatpush1.bf16.msra.mxu0 %v493
    %656 = vmatprep.subr.bf16.mxu0 0
    %657 = vmatpush1.bf16.msra.mxu0 %v494
    %658 = vmatprep.subr.bf16.mxu0 0
    %659 = vmatpush1.bf16.msra.mxu0 %v495
    %660 = vmatprep.subr.bf16.mxu0 0
    %661 = vmatpush1.bf16.msra.mxu0 %v496
    %662 = vmatprep.subr.bf16.mxu0 0
    %663 = vmatpush1.bf16.msra.mxu0 %v497
    %664 = vmatprep.subr.bf16.mxu0 0
    %665 = vmatpush1.bf16.msra.mxu0 %v498
    %666 = vmatprep.subr.bf16.mxu0 0
    %667 = vmatpush1.bf16.msra.mxu0 %v499
    %668 = vmatprep.mubr.bf16.mxu0 %v72
    %669 = vmatmul.mubr.bf16.gmra.mrb[0].mxu0 %v71
    %v670 = vpop.f32.mrb[0].mxu0
    %v671 = vadd.f32 %v631, %v670
    %v672 = vpop.f32.mrb[0].mxu0
    %v673 = vpop.f32.mrb[0].mxu0
    %v674 = vpop.f32.mrb[0].mxu0
    %675 = vdwg.mxu0
    %676 = vmatprep.subr.bf16.mxu0 0
    %677 = vmatpush1.bf16.msra.mxu0 %v500
    %678 = vmatprep.subr.bf16.mxu0 0
    %679 = vmatpush1.bf16.msra.mxu0 %v501
    %680 = vmatprep.subr.bf16.mxu0 0
    %681 = vmatpush1.bf16.msra.mxu0 %v502
    %682 = vmatprep.subr.bf16.mxu0 0
    %683 = vmatpush1.bf16.msra.mxu0 %v503
    %684 = vmatprep.subr.bf16.mxu0 0
    %685 = vmatpush1.bf16.msra.mxu0 %v504
    %686 = vmatprep.subr.bf16.mxu0 0
    %687 = vmatpush1.bf16.msra.mxu0 %v505
    %688 = vmatprep.subr.bf16.mxu0 0
    %689 = vmatpush1.bf16.msra.mxu0 %v506
    %690 = vmatprep.subr.bf16.mxu0 0
    %691 = vmatpush1.bf16.msra.mxu0 %v507
    %692 = vmatprep.subr.bf16.mxu0 0
    %693 = vmatpush1.bf16.msra.mxu0 %v508
    %694 = vmatprep.subr.bf16.mxu0 0
    %695 = vmatpush1.bf16.msra.mxu0 %v509
    %696 = vmatprep.subr.bf16.mxu0 0
    %697 = vmatpush1.bf16.msra.mxu0 %v510
    %698 = vmatprep.subr.bf16.mxu0 0
    %699 = vmatpush1.bf16.msra.mxu0 %v511
    %700 = vmatprep.subr.bf16.mxu0 0
    %701 = vmatpush1.bf16.msra.mxu0 %v512
    %702 = vmatprep.subr.bf16.mxu0 0
    %703 = vmatpush1.bf16.msra.mxu0 %v513
    %704 = vmatprep.subr.bf16.mxu0 0
    %705 = vmatpush1.bf16.msra.mxu0 %v514
    %706 = vmatprep.subr.bf16.mxu0 0
    %707 = vmatpush1.bf16.msra.mxu0 %v515
    %708 = vmatprep.mubr.bf16.mxu0 %v74
    %709 = vmatmul.mubr.bf16.gmra.mrb[0].mxu0 %v73
    %v710 = vpop.f32.mrb[0].mxu0
    %v711 = vadd.f32 %v671, %v710
    %v712 = vpop.f32.mrb[0].mxu0
    %v713 = vpop.f32.mrb[0].mxu0
    %v714 = vpop.f32.mrb[0].mxu0
    %715 = vdwg.mxu0
    %716 = vmatprep.subr.bf16.mxu0 0
    %717 = vmatpush1.bf16.msra.mxu0 %v516
    %718 = vmatprep.subr.bf16.mxu0 0
    %719 = vmatpush1.bf16.msra.mxu0 %v517
    %720 = vmatprep.subr.bf16.mxu0 0
    %721 = vmatpush1.bf16.msra.mxu0 %v518
    %722 = vmatprep.subr.bf16.mxu0 0
    %723 = vmatpush1.bf16.msra.mxu0 %v519
    %724 = vmatprep.subr.bf16.mxu0 0
    %725 = vmatpush1.bf16.msra.mxu0 %v520
    %726 = vmatprep.subr.bf16.mxu0 0
    %727 = vmatpush1.bf16.msra.mxu0 %v521
    %728 = vmatprep.subr.bf16.mxu0 0
    %729 = vmatpush1.bf16.msra.mxu0 %v522
    %730 = vmatprep.subr.bf16.mxu0 0
    %731 = vmatpush1.bf16.msra.mxu0 %v523
    %732 = vmatprep.subr.bf16.mxu0 0
    %733 = vmatpush1.bf16.msra.mxu0 %v524
    %734 = vmatprep.subr.bf16.mxu0 0
    %735 = vmatpush1.bf16.msra.mxu0 %v525
    %736 = vmatprep.subr.bf16.mxu0 0
    %737 = vmatpush1.bf16.msra.mxu0 %v526
    %738 = vmatprep.subr.bf16.mxu0 0
    %739 = vmatpush1.bf16.msra.mxu0 %v527
    %740 = vmatprep.subr.bf16.mxu0 0
    %741 = vmatpush1.bf16.msra.mxu0 %v528
    %742 = vmatprep.subr.bf16.mxu0 0
    %743 = vmatpush1.bf16.msra.mxu0 %v529
    %744 = vmatprep.subr.bf16.mxu0 0
    %745 = vmatpush1.bf16.msra.mxu0 %v530
    %746 = vmatprep.subr.bf16.mxu0 0
    %747 = vmatpush1.bf16.msra.mxu0 %v531
    %748 = vmatprep.mubr.bf16.mxu0 %v76
    %749 = vmatmul.mubr.bf16.gmra.mrb[0].mxu0 %v75
    %v750 = vpop.f32.mrb[0].mxu0
    %v751 = vadd.f32 %v711, %v750
    %v752 = vpop.f32.mrb[0].mxu0
    %v753 = vpop.f32.mrb[0].mxu0
    %v754 = vpop.f32.mrb[0].mxu0
    %755 = vdwg.mxu0
    %v756 = vmax.f32 %v751, 0.0
    %v757 = vpack.c.bf16 %v756, %v756
    %v758 = vld [vmem:[#allocation7] sm:$0xf]
    %v759 = vld [vmem:[#allocation7 + $0x4] sm:$0xf]
    %v760 = vld [vmem:[#allocation7 + $0x8] sm:$0xf]
    %v761 = vld [vmem:[#allocation7 + $0xc] sm:$0xf]
    %v762 = vld [vmem:[#allocation7 + $0x10] sm:$0xf]
    %v763 = vld [vmem:[#allocation7 + $0x14] sm:$0xf]
    %v764 = vld [vmem:[#allocation7 + $0x18] sm:$0xf]
    %v765 = vld [vmem:[#allocation7 + $0x1c] sm:$0xf]
    %v766 = vld [vmem:[#allocation7 + $0x20] sm:$0xf]
    %v767 = vld [vmem:[#allocation7 + $0x24] sm:$0xf]
    %v768 = vld [vmem:[#allocation7 + $0x28] sm:$0xf]
    %v769 = vld [vmem:[#allocation7 + $0x2c] sm:$0xf]
    %v770 = vld [vmem:[#allocation7 + $0x30] sm:$0xf]
    %v771 = vld [vmem:[#allocation7 + $0x34] sm:$0xf]
    %v772 = vld [vmem:[#allocation7 + $0x38] sm:$0xf]
    %v773 = vld [vmem:[#allocation7 + $0x3c] sm:$0xf]
    %v774 = vld [vmem:[%s4] sm:$0x1]
    %v776 = vlaneseq
    %v777 = vshrl.u32 %v776, 7
    %v778 = vsub.s32 0, %v777
    %v779 = vrot.slane %v774, %v778
    %v797 = vunpack.c.l.b16 %v758
    %v798 = vunpack.c.l.b16 %v759
    %v799 = vunpack.c.l.b16 %v760
    %v800 = vunpack.c.l.b16 %v761
    %v801 = vunpack.c.l.b16 %v762
    %v802 = vunpack.c.l.b16 %v763
    %v803 = vunpack.c.l.b16 %v764
    %v804 = vunpack.c.l.b16 %v765
    %v805 = vunpack.c.l.b16 %v766
    %v806 = vunpack.c.l.b16 %v767
    %v807 = vunpack.c.l.b16 %v768
    %v808 = vunpack.c.l.b16 %v769
    %v809 = vunpack.c.l.b16 %v770
    %v810 = vunpack.c.l.b16 %v771
    %v811 = vunpack.c.l.b16 %v772
    %v812 = vunpack.c.l.b16 %v773
    %v813 = vpack.c.b16 %v798, %v797
    %v814 = vpack.c.b16 %v800, %v799
    %v815 = vpack.c.b16 %v802, %v801
    %v816 = vpack.c.b16 %v804, %v803
    %v817 = vpack.c.b16 %v806, %v805
    %v818 = vpack.c.b16 %v808, %v807
    %v819 = vpack.c.b16 %v810, %v809
    %v820 = vpack.c.b16 %v812, %v811
    %829 = vmatprep.subr.bf16.mxu0 0
    %830 = vmatpush1.bf16.msra.mxu0 %v813
    %831 = vmatprep.subr.bf16.mxu0 0
    %832 = vmatpush1.bf16.msra.mxu0 %v814
    %833 = vmatprep.subr.bf16.mxu0 0
    %834 = vmatpush1.bf16.msra.mxu0 %v815
    %835 = vmatprep.subr.bf16.mxu0 0
    %836 = vmatpush1.bf16.msra.mxu0 %v816
    %837 = vmatprep.subr.bf16.mxu0 0
    %838 = vmatpush1.bf16.msra.mxu0 %v817
    %839 = vmatprep.subr.bf16.mxu0 0
    %840 = vmatpush1.bf16.msra.mxu0 %v818
    %841 = vmatprep.subr.bf16.mxu0 0
    %842 = vmatpush1.bf16.msra.mxu0 %v819
    %843 = vmatprep.subr.bf16.mxu0 0
    %844 = vmatpush1.bf16.msra.mxu0 %v820
    %845 = vmatprep.subr.bf16.mxu0 0
    %846 = vmatpush1.bf16.msra.mxu0 0
    %847 = vmatprep.subr.bf16.mxu0 0
    %848 = vmatpush1.bf16.msra.mxu0 0
    %849 = vmatprep.subr.bf16.mxu0 0
    %850 = vmatpush1.bf16.msra.mxu0 0
    %851 = vmatprep.subr.bf16.mxu0 0
    %852 = vmatpush1.bf16.msra.mxu0 0
    %853 = vmatprep.subr.bf16.mxu0 0
    %854 = vmatpush1.bf16.msra.mxu0 0
    %855 = vmatprep.subr.bf16.mxu0 0
    %856 = vmatpush1.bf16.msra.mxu0 0
    %857 = vmatprep.subr.bf16.mxu0 0
    %858 = vmatpush1.bf16.msra.mxu0 0
    %859 = vmatprep.subr.bf16.mxu0 0
    %860 = vmatpush1.bf16.msra.mxu0 0
    %861 = vmatprep.mubr.bf16.mxu0 0
    %862 = vmatmul.mubr.bf16.gmra.mrb[0].mxu0 %v757
    %v863 = vpop.f32.mrb[0].mxu0
    %v864 = vadd.f32 %v779, %v863
    %v865 = vpop.f32.mrb[0].mxu0
    %v866 = vpop.f32.mrb[0].mxu0
    %v867 = vpop.f32.mrb[0].mxu0
    %868 = vdwg.mxu0
    %869 = vst [vmem:[#allocation8] sm:$0xff] %v864
    // Predicated region
    $region34: #{tpu_custom_call.1} parent=1 // pred_check
      _
    $region35: #{tpu_custom_call.1} parent=1 // pred_check_branch
      %871 = sbr.rel (0) target = $region37
    $region36: #{tpu_custom_call.1} parent=1 // pred_region
      %s873 = ssub.s32 128, 128
      %874 = vsyncadd [#allocation4], %s873
      %s876 = sshll.u32 [#allocation8], 4
      %s877 = int_to_ptr.vmem [resolvable:$true] %s876
      %879 = dma.vmem_to_hbm [thread:$0]  %s877, 128, %s5, [#allocation4]
    $region37: #{tpu_custom_call.1} parent=1 // pred_fallthru
      _
    // Predicated region
    $region38: #{tpu_custom_call.1} parent=1 // pred_check
      _
    $region39: #{tpu_custom_call.1} parent=1 // pred_check_branch
      %881 = sbr.rel (0) target = $region41
    $region40: #{tpu_custom_call.1} parent=1 // pred_region
      %882 = dma.done [#allocation4], 128
    $region41: #{tpu_custom_call.1} parent=1 // pred_fallthru
      _
    %883 = vsyncpa [#allocation3], 1
    %884 = vsyncpa [#allocation6], 1
    %885 = vsyncpa [#allocation4], 1

</llo_original>
